<compile_context>
chip_gen: v6e
topology: v6e:2x2x1
jax: 0.10.0
libtpu: 0.0.40
codegen_flags: <defaults>
</compile_context>

<pallas_src>
import functools

import jax
import jax.numpy as jnp
from jax.experimental import pallas as pl
from jax.experimental.pallas import tpu as pltpu

_NEG_BIG = jnp.float32(-1e30)  # effectively -inf for padded softmax lanes (finite => no NaN)


def _round_up(a, m):
    return ((a + m - 1) // m) * m


def targetnet_kernel(x_ref, w_ref, b_ref, o_ref, *, matmul_dtype):
    x = x_ref[...]          # [bb, H]
    w = w_ref[...]          # [H, O_pad]   (pre-transposed in wrapper; standard MN operand)
    b = b_ref[...]          # [1, O_pad]   (padded lanes hold -1e30)

    if jnp.dtype(matmul_dtype) != jnp.dtype(jnp.float32):
        x = x.astype(matmul_dtype)
        w = w.astype(matmul_dtype)

    logits = jnp.dot(x, w, preferred_element_type=jnp.float32) + b   # [bb, O_pad], f32

    # Numerically stable softmax over the (padded) lane axis.
    m = jnp.max(logits, axis=-1, keepdims=True)
    e = jnp.exp(logits - m)                              # padded lanes -> exp(-huge) = 0
    s = jnp.sum(e, axis=-1, keepdims=True)
    inv_s = pl.reciprocal(s, approx=True)                # EUP vrcp: its own VLIW slot, ~free
    o_ref[...] = (e * inv_s).astype(o_ref.dtype)


def targetnet_forward(x, gate_weights, gate_bias, out_dim, target_hidden_dim,
                      *, max_block_rows=1024, matmul_dtype=jnp.float32,
                      out_dtype=jnp.float32):
    """x: [B, target_hidden_dim]; gate_weights: flat [out_dim*hidden]; gate_bias: [out_dim]."""
    B, H = x.shape
    assert H == target_hidden_dim
    O = out_dim

    # ---- one-time wrapper-side layout plumbing (tiny arrays, plain XLA) ----
    # Pre-transpose weight to [H, O_pad]: the MXU consumes it directly as a
    # standard (K, N) operand -> guaranteed no per-grid-step transpose in-kernel.
    w = gate_weights.reshape(O, H).astype(jnp.float32)
    O_pad = max(128, _round_up(O, 128))                  # minimum lane-dense output width
    w_pad = jnp.zeros((H, O_pad), jnp.float32).at[:, :O].set(w.T)
    b_pad = jnp.full((1, O_pad), _NEG_BIG, jnp.float32).at[0, :O].set(
        gate_bias.astype(jnp.float32))

    # Batch tile: large (amortize per-step overhead + DMA), sublane aligned, and
    # when B is large enough at least 2 grid steps so both v7x TCs receive work.
    if B <= 8:
        bb = B                                           # block == full dim: allowed
    else:
        bb = min(max_block_rows, _round_up(B, 8))
        if B > 16:
            bb = min(bb, max(8, _round_up(pl.cdiv(B, 2), 8)))
    grid = (pl.cdiv(B, bb),)   # ragged trailing block handled by Pallas; no x padding copy

    # VMEM headroom: only relevant for very large bb on v5e's 16 MiB scoped default.
    out_bytes = jnp.dtype(out_dtype).itemsize
    est = 2 * (bb * H * 4 + bb * O_pad * out_bytes) + H * O_pad * 4 + O_pad * 4
    extra = {}
    if est > (8 << 20):
        extra["vmem_limit_bytes"] = int(min(max(2 * est, 16 << 20), 64 << 20))

    kernel = functools.partial(targetnet_kernel, matmul_dtype=matmul_dtype)

    out = pl.pallas_call(
        kernel,
        out_shape=jax.ShapeDtypeStruct((B, O_pad), out_dtype),
        grid_spec=pltpu.PrefetchScalarGridSpec(
            num_scalar_prefetch=0,
            grid=grid,
            in_specs=[
                pl.BlockSpec((bb, H), lambda i: (i, 0)),      # x rows for this step
                pl.BlockSpec((H, O_pad), lambda i: (0, 0)),   # resident (padded) weight
                pl.BlockSpec((1, O_pad), lambda i: (0, 0)),   # resident (padded) bias
            ],
            out_specs=pl.BlockSpec((bb, O_pad), lambda i: (i, 0)),
        ),
        compiler_params=pltpu.CompilerParams(
            dimension_semantics=("parallel",),   # v7x: shard batch grid across both TCs
            **extra,
        ),
    )(x, w_pad, b_pad)

    return out[:, :O]


if __name__ == "__main__":
    out_dim = 10
    target_hidden_dim = 50
    batch = 8

    key = jax.random.PRNGKey(0)
    kx, kw, kb = jax.random.split(key, 3)

    # Deterministic synthetic inputs / "hypernetwork-generated" weights.
    x = jax.random.normal(kx, (batch, target_hidden_dim), dtype=jnp.float32)
    gate_weights = jax.random.normal(kw, (out_dim * target_hidden_dim,), dtype=jnp.float32) * 0.1
    gate_bias = jax.random.normal(kb, (out_dim,), dtype=jnp.float32) * 0.1

    out = jax.block_until_ready(
        targetnet_forward(x, gate_weights, gate_bias, out_dim, target_hidden_dim))
    assert out.shape == (batch, out_dim)

    # Reference (exact F.linear semantics; f32 MXU operands by default, so the
    # only kernel-side deviation is the approx EUP reciprocal, ~1e-3 relative).
    w = gate_weights.reshape(out_dim, target_hidden_dim)
    ref = jax.nn.softmax(x @ w.T + gate_bias, axis=1)

    assert jnp.allclose(out, ref, atol=5e-3, rtol=5e-3), "mismatch vs f32 reference"
    assert jnp.allclose(jnp.sum(out, axis=1), 1.0, atol=5e-3), "softmax rows must sum to ~1"
    assert jnp.array_equal(jnp.argmax(out, axis=1), jnp.argmax(ref, axis=1))

    # Larger, ragged batch: exercises >=2 grid steps (v7x dual-TC split) and the
    # partial trailing block path (no wrapper-side padding copy of x).
    batch2 = 300
    x2 = jax.random.normal(kx, (batch2, target_hidden_dim), dtype=jnp.float32)
    out2 = jax.block_until_ready(
        targetnet_forward(x2, gate_weights, gate_bias, out_dim, target_hidden_dim))
    ref2 = jax.nn.softmax(x2 @ w.T + gate_bias, axis=1)
    assert out2.shape == (batch2, out_dim)
    assert jnp.allclose(out2, ref2, atol=5e-3, rtol=5e-3), "batched mismatch vs reference"
    assert jnp.allclose(jnp.sum(out2, axis=1), 1.0, atol=5e-3)
    assert jnp.array_equal(jnp.argmax(out2, axis=1), jnp.argmax(ref2, axis=1))

    print("KERNEL_OK")
</pallas_src>

<mosaic_0001>
module attributes {stable_mosaic.version = 11 : i64} {
  func.func @targetnet_kernel(%arg0: i32, %arg1: memref<8x50xf32, #tpu.memory_space<vmem>>, %arg2: memref<50x128xf32, #tpu.memory_space<vmem>>, %arg3: memref<1x128xf32, #tpu.memory_space<vmem>>, %arg4: memref<8x128xf32, #tpu.memory_space<vmem>>) attributes {dimension_semantics = [#tpu.dimension_semantics<parallel>], iteration_bounds = array<i64: 1>, scalar_prefetch = 0 : i64, scratch_operands = 0 : i64, tpu.core_type = #tpu.core_type<tc>, window_params = [{transform_indices = @transform_0, window_bounds = array<i64: 8, 50>}, {pipeline_mode = #tpu.pipeline_mode<synchronous>, transform_indices = @transform_1, window_bounds = array<i64: 50, 128>}, {pipeline_mode = #tpu.pipeline_mode<synchronous>, transform_indices = @transform_2, window_bounds = array<i64: 1, 128>}, {transform_indices = @transform_3, window_bounds = array<i64: 8, 128>}]} {
    %c0 = arith.constant 0 : index
    %c0_0 = arith.constant 0 : index
    %0 = vector.load %arg1[%c0, %c0_0] : memref<8x50xf32, #tpu.memory_space<vmem>>, vector<8x50xf32>
    %c0_1 = arith.constant 0 : index
    %c0_2 = arith.constant 0 : index
    %1 = vector.load %arg2[%c0_1, %c0_2] : memref<50x128xf32, #tpu.memory_space<vmem>>, vector<50x128xf32>
    %c0_3 = arith.constant 0 : index
    %c0_4 = arith.constant 0 : index
    %2 = vector.load %arg3[%c0_3, %c0_4] : memref<1x128xf32, #tpu.memory_space<vmem>>, vector<1x128xf32>
    %cst = arith.constant dense<0.000000e+00> : vector<8x128xf32>
    %3 = tpu.matmul %0, %1, %cst {dimension_numbers = #tpu.dot_dimension_numbers<[1], [0], [0], [1], [0, 0, 1, 1], [], []>} : vector<8x50xf32>, vector<50x128xf32>, vector<8x128xf32> -> vector<8x128xf32>
    %4 = vector.broadcast %2 : vector<1x128xf32> to vector<8x128xf32>
    %5 = arith.addf %3, %4 : vector<8x128xf32>
    %cst_5 = arith.constant dense<0xFF800000> : vector<8xf32>
    %6 = vector.multi_reduction <maximumf>, %5, %cst_5 [1] : vector<8x128xf32> to vector<8xf32>
    %7 = vector.shape_cast %6 : vector<8xf32> to vector<8x1xf32>
    %8 = vector.broadcast %7 : vector<8x1xf32> to vector<8x128xf32>
    %9 = arith.subf %5, %8 : vector<8x128xf32>
    %10 = math.exp %9 : vector<8x128xf32>
    %cst_6 = arith.constant dense<0.000000e+00> : vector<8xf32>
    %11 = vector.multi_reduction <add>, %10, %cst_6 [1] : vector<8x128xf32> to vector<8xf32>
    %12 = vector.shape_cast %11 : vector<8xf32> to vector<8x1xf32>
    %13 = tpu.reciprocal %12 {approx = true} : vector<8x1xf32> -> vector<8x1xf32>
    %14 = vector.broadcast %13 : vector<8x1xf32> to vector<8x128xf32>
    %15 = arith.mulf %10, %14 : vector<8x128xf32>
    %c0_7 = arith.constant 0 : index
    %c0_8 = arith.constant 0 : index
    %16 = vector.load %arg4[%c0_7, %c0_8] : memref<8x128xf32, #tpu.memory_space<vmem>>, vector<8x128xf32>
    tpu.vector_store %arg4[%c0_7, %c0_8], %15 {strides = array<i32>} : memref<8x128xf32, #tpu.memory_space<vmem>>, vector<8x128xf32>,
    return
  }
  func.func @transform_0(%arg0: i32) -> (i32, i32) {
    %c0_i32 = arith.constant 0 : i32
    %c0_i32_0 = arith.constant 0 : i32
    return %arg0, %c0_i32 : i32, i32
  }
  func.func @transform_1(%arg0: i32) -> (i32, i32) {
    %c0_i32 = arith.constant 0 : i32
    %c0_i32_0 = arith.constant 0 : i32
    %c0_i32_1 = arith.constant 0 : i32
    return %c0_i32, %c0_i32_0 : i32, i32
  }
  func.func @transform_2(%arg0: i32) -> (i32, i32) {
    %c0_i32 = arith.constant 0 : i32
    %c0_i32_0 = arith.constant 0 : i32
    %c0_i32_1 = arith.constant 0 : i32
    return %c0_i32, %c0_i32_0 : i32, i32
  }
  func.func @transform_3(%arg0: i32) -> (i32, i32) {
    %c0_i32 = arith.constant 0 : i32
    %c0_i32_0 = arith.constant 0 : i32
    return %arg0, %c0_i32 : i32, i32
  }
}

</mosaic_0001>

<llo_original>
// kernel: tpu_custom_call.1
$region0: #{tpu_custom_call.1}
  #allocation0 [shape = 'u32[]', space=smem, size = 0x4, offset = 0x4, fixed_abs, tag = 'smem constant byte address 0x4 - core index']
  #allocation1 [shape = 'u32[144,128]{1,0:T(1,128)}', space=vmem, size = 0x12000, scoped, tag = 'internal scratch']
  %s0 = inlined_call_operand.hbm [shape: f32[8,50], index: 0, kind: input, shape index: {}]
  %s1 = inlined_call_operand.hbm [shape: f32[50,128], index: 1, kind: input, shape index: {}]
  %s2 = inlined_call_operand.vmem [shape: f32[1,128], index: 2, kind: input, shape index: {}]
  %s3 = inlined_call_operand.hbm [shape: f32[8,128], index: 3, kind: output, shape index: {}]
  %s4 = sld [smem:[#allocation0]]
  $region30: #{tpu_custom_call.1} parent=0
    _
  %s6 = ssub.s32 1, %s4
  %s7 = scalar_select 0, %s6, %s4
  $region1: #{tpu_custom_call.1} parent=0
    #allocation2 [shape = 'u8[4096]{0}', space=vmem, size = 0x1000, scoped, tag = 'input window, operand 0, single buffered']
    #allocation3 [shape = 's32[1]{0}', space=sflag, size = 0x4, scoped, tag = 'scoped memory for tpu_custom_call.1']
    #allocation4 [shape = 's32[1]{0}', space=sflag, size = 0x4, scoped, tag = 'scoped memory for tpu_custom_call.1']
    #allocation5 [shape = 'u8[28672]{0}', space=vmem, size = 0x7000, scoped, tag = 'input window, operand 1, single buffered']
    #allocation6 [shape = 's32[1]{0}', space=sflag, size = 0x4, scoped, tag = 'scoped memory for tpu_custom_call.1']
    #allocation7 [shape = 'u8[4096]{0}', space=vmem, size = 0x1000, scoped, tag = 'output window, operand 0, single buffered']
    %8 = vsyncpa [#allocation3], 0
    %9 = vsyncpa [#allocation6], 0
    %10 = vsyncpa [#allocation4], 0
    // Predicated region
    $region2: #{tpu_custom_call.1} parent=1 // pred_check
      _
    $region3: #{tpu_custom_call.1} parent=1 // pred_check_branch
      %12 = sbr.rel (0) target = $region5
    $region4: #{tpu_custom_call.1} parent=1 // pred_region
      %s14 = ssub.s32 128, 128
      %15 = vsyncadd [#allocation3], %s14
      %s17 = sshll.u32 [#allocation2], 4
      %s18 = int_to_ptr.vmem [resolvable:$true] %s17
      %20 = dma.hbm_to_vmem [thread:$0]  %s0, 128, %s18, [#allocation3]
    $region5: #{tpu_custom_call.1} parent=1 // pred_fallthru
      _
    // Predicated region
    $region6: #{tpu_custom_call.1} parent=1 // pred_check
      _
    $region7: #{tpu_custom_call.1} parent=1 // pred_check_branch
      %22 = sbr.rel (0) target = $region9
    $region8: #{tpu_custom_call.1} parent=1 // pred_region
      %s24 = ssub.s32 896, 896
      %25 = vsyncadd [#allocation6], %s24
      %s26 = sshll.u32 [#allocation5], 4
      %s27 = int_to_ptr.vmem [resolvable:$true] %s26
      %32 = dma.hbm_to_vmem [thread:$0]  %s1, 896, %s27, [#allocation6], 128, 128, 8
    $region9: #{tpu_custom_call.1} parent=1 // pred_fallthru
      _
    // Predicated region
    $region10: #{tpu_custom_call.1} parent=1 // pred_check
      _
    $region11: #{tpu_custom_call.1} parent=1 // pred_check_branch
      %34 = sbr.rel (0) target = $region13
    $region12: #{tpu_custom_call.1} parent=1 // pred_region
      _
    $region13: #{tpu_custom_call.1} parent=1 // pred_fallthru
      _
    // Predicated region
    $region14: #{tpu_custom_call.1} parent=1 // pred_check
      _
    $region15: #{tpu_custom_call.1} parent=1 // pred_check_branch
      %36 = sbr.rel (0) target = $region17
    $region16: #{tpu_custom_call.1} parent=1 // pred_region
      %37 = dma.done [#allocation3], 128
    $region17: #{tpu_custom_call.1} parent=1 // pred_fallthru
      _
    // Predicated region
    $region18: #{tpu_custom_call.1} parent=1 // pred_check
      _
    $region19: #{tpu_custom_call.1} parent=1 // pred_check_branch
      %39 = sbr.rel (0) target = $region21
    $region20: #{tpu_custom_call.1} parent=1 // pred_region
      %40 = dma.done [#allocation6], 896
    $region21: #{tpu_custom_call.1} parent=1 // pred_fallthru
      _
    %v41 = vld [vmem:[#allocation2] sm:$0xff]
    %v42 = vld [vmem:[#allocation5] sm:$0xff]
    %v43 = vld [vmem:[#allocation5 + $0x8] sm:$0xff]
    %v44 = vld [vmem:[#allocation5 + $0x10] sm:$0xff]
    %v45 = vld [vmem:[#allocation5 + $0x18] sm:$0xff]
    %v46 = vld [vmem:[#allocation5 + $0x20] sm:$0xff]
    %v47 = vld [vmem:[#allocation5 + $0x28] sm:$0xff]
    %v48 = vld [vmem:[#allocation5 + $0x30] sm:$0x3]
    %v49 = vld [vmem:[%s2] sm:$0x1]
    %v51 = vlaneseq
    %v52 = vshrl.u32 %v51, 7
    %v53 = vsub.s32 0, %v52
    %v54 = vrot.slane %v49, %v53
    %vm56 = vcmask 408576
    %v58 = vsel %vm56, %v41, 0
    %vm60 = vcmask 1041408
    %v62 = vsel %vm60, %v48, 0
    %64 = vmatprep.subr.mxu0 0.0
    %65 = vmatpush1.msra.mxu0 0.0
    %66 = vmatprep.subr.mxu0 0.0
    %67 = vmatpush1.msra.mxu0 0.0
    %68 = vmatprep.subr.mxu0 0.0
    %69 = vmatpush1.msra.mxu0 0.0
    %70 = vmatprep.subr.mxu0 0.0
    %71 = vmatpush1.msra.mxu0 0.0
    %72 = vmatprep.subr.mxu0 0.0
    %73 = vmatpush1.msra.mxu0 0.0
    %74 = vmatprep.subr.mxu0 0.0
    %75 = vmatpush1.msra.mxu0 0.0
    %76 = vmatprep.subr.mxu0 0.0
    %77 = vmatpush1.msra.mxu0 0.0
    %78 = vmatprep.subr.mxu0 0.0
    %79 = vmatpush1.msra.mxu0 0.0
    %80 = vmatprep.subr.mxu0 0.0
    %81 = vmatpush1.msra.mxu0 0.0
    %82 = vmatprep.subr.mxu0 0.0
    %83 = vmatpush1.msra.mxu0 %v62
    %84 = vmatprep.subr.mxu0 0.0
    %85 = vmatpush1.msra.mxu0 %v47
    %86 = vmatprep.subr.mxu0 0.0
    %87 = vmatpush1.msra.mxu0 %v46
    %88 = vmatprep.subr.mxu0 0.0
    %89 = vmatpush1.msra.mxu0 %v45
    %90 = vmatprep.subr.mxu0 0.0
    %91 = vmatpush1.msra.mxu0 %v44
    %92 = vmatprep.subr.mxu0 0.0
    %93 = vmatpush1.msra.mxu0 %v43
    %94 = vmatprep.subr.mxu0 0.0
    %95 = vmatpush1.msra.mxu0 %v42
    %96 = vmatprep.subr.mxu0 0.0
    %97 = vmatpush2.msra.mxu0 0.0
    %98 = vmatprep.subr.mxu0 0.0
    %99 = vmatpush2.msra.mxu0 0.0
    %100 = vmatprep.subr.mxu0 0.0
    %101 = vmatpush2.msra.mxu0 0.0
    %102 = vmatprep.subr.mxu0 0.0
    %103 = vmatpush2.msra.mxu0 0.0
    %104 = vmatprep.subr.mxu0 0.0
    %105 = vmatpush2.msra.mxu0 0.0
    %106 = vmatprep.subr.mxu0 0.0
    %107 = vmatpush2.msra.mxu0 0.0
    %108 = vmatprep.subr.mxu0 0.0
    %109 = vmatpush2.msra.mxu0 0.0
    %110 = vmatprep.subr.mxu0 0.0
    %111 = vmatpush2.msra.mxu0 0.0
    %112 = vmatprep.subr.mxu0 0.0
    %113 = vmatpush2.msra.mxu0 0.0
    %114 = vmatprep.subr.mxu0 0.0
    %115 = vmatpush2.msra.mxu0 0.0
    %116 = vmatprep.subr.mxu0 0.0
    %117 = vmatpush2.msra.mxu0 0.0
    %118 = vmatprep.subr.mxu0 0.0
    %119 = vmatpush2.msra.mxu0 0.0
    %120 = vmatprep.subr.mxu0 0.0
    %121 = vmatpush2.msra.mxu0 0.0
    %122 = vmatprep.subr.mxu0 0.0
    %123 = vmatpush2.msra.mxu0 0.0
    %124 = vmatprep.subr.mxu0 0.0
    %125 = vmatpush2.msra.mxu0 0.0
    %126 = vmatprep.subr.mxu0 0.0
    %127 = vmatpush2.msra.mxu0 0.0
    %128 = vmatprep.mubr.f32.mxu0 0.0
    %129 = vmatmul.mubr.f32.gmra.mxu0 %v58
    %v130 = vpop.f32.mrf.mxu0
    %v131 = vadd.f32 %v54, %v130
    %v132 = vpop.f32.mrf.mxu0
    %133 = vdwg.mxu0
    %134 = vmax.xlane.f32.xlu0 %v131
    %v135 = vpop.xlane.xlu0 %134
    %v136 = vsub.f32 %v131, %v135
    %v137 = vmul.f32 %v136, 1.442695
    %v138 = vpow.pop %v137
    %139 = vadd.xlane.f32.xlu0 %v138
    %v140 = vpop.xlane.xlu0 %139
    %v141 = vrcp.pop %v140
    %v142 = vmul.f32 %v138, %v141
    %143 = vst [vmem:[#allocation7] sm:$0xff] %v142
    // Predicated region
    $region22: #{tpu_custom_call.1} parent=1 // pred_check
      _
    $region23: #{tpu_custom_call.1} parent=1 // pred_check_branch
      %145 = sbr.rel (0) target = $region25
    $region24: #{tpu_custom_call.1} parent=1 // pred_region
      %s147 = ssub.s32 128, 128
      %148 = vsyncadd [#allocation4], %s147
      %s150 = sshll.u32 [#allocation7], 4
      %s151 = int_to_ptr.vmem [resolvable:$true] %s150
      %153 = dma.vmem_to_hbm [thread:$0]  %s151, 128, %s3, [#allocation4]
    $region25: #{tpu_custom_call.1} parent=1 // pred_fallthru
      _
    // Predicated region
    $region26: #{tpu_custom_call.1} parent=1 // pred_check
      _
    $region27: #{tpu_custom_call.1} parent=1 // pred_check_branch
      %155 = sbr.rel (0) target = $region29
    $region28: #{tpu_custom_call.1} parent=1 // pred_region
      %156 = dma.done [#allocation4], 128
    $region29: #{tpu_custom_call.1} parent=1 // pred_fallthru
      _
    %157 = vsyncpa [#allocation3], 1
    %158 = vsyncpa [#allocation6], 1
    %159 = vsyncpa [#allocation4], 1

</llo_original>
